<compile_context>
chip_gen: v7x
topology: tpu7x:2x2x1
jax: 0.10.0
libtpu: 0.0.40
codegen_flags: <defaults>
</compile_context>

<pallas_src>
import functools

import jax
import jax.numpy as jnp
import numpy as np
from jax.experimental import pallas as pl
from jax.experimental.pallas import tpu as pltpu


# ------------------------------ Pallas kernel -------------------------------

def _focal_kernel(x_ref, t_ref, o_ref, *, gamma, alpha, num_classes):
    """Fused focal loss for one (block_rows, 128) tile of pixels.

    x_ref: (C, block_rows, 128) logits (class axis leading, any float dtype).
    t_ref: (block_rows, 128)    integer target class per pixel (int8/int32).
    o_ref: (block_rows, 128)    f32 per-pixel loss.
    """
    t = t_ref[...].astype(jnp.int32)            # (BR, 128)

    # max over classes: leading-axis reduction -> plain VPU maximum of vregs
    xmax = x_ref[0].astype(jnp.float32)
    for c in range(1, num_classes):
        xmax = jnp.maximum(xmax, x_ref[c].astype(jnp.float32))

    # sum(exp) + "gather" of the target logit / exp / alpha via
    # select-over-classes (C is tiny: 2 for pixellink) -> VPU only, no XLU.
    sumexp = jnp.zeros_like(xmax)
    exp_sel = jnp.zeros_like(xmax)
    sel = jnp.zeros_like(xmax)
    at = jnp.zeros_like(xmax) if alpha is not None else None
    for c in range(num_classes):
        x_c = x_ref[c].astype(jnp.float32)
        e_c = jnp.exp(x_c - xmax)
        sumexp = sumexp + e_c
        mask = t == c
        sel = jnp.where(mask, x_c, sel)
        exp_sel = jnp.where(mask, e_c, exp_sel)   # reuse exp for pt (EUP save)
        if alpha is not None:
            at = jnp.where(mask, jnp.float32(alpha[c]), at)

    logpt = (sel - xmax) - jnp.log(sumexp)      # log_softmax at target class
    pt = exp_sel / sumexp                       # softmax at target (detach() is a fwd no-op)
    if alpha is not None:
        logpt = logpt * at

    g = float(gamma)
    base = jnp.maximum(1.0 - pt, 0.0)           # clamp: avoids NaN for frac. gamma
    if g == round(g) and 0.0 <= g <= 8.0:
        # integer gamma -> plain VPU multiplies, no pow/log round-trip
        w = jnp.ones_like(base)
        for _ in range(int(round(g))):
            w = w * base
    else:
        w = jnp.power(base, g)

    o_ref[...] = (-w * logpt).astype(o_ref.dtype)


# --------------------------------- wrapper ----------------------------------

def focal_loss(logits, target, gamma=2.0, alpha=None):
    """logits: (B, C, H, W) float; target: (B, H, W) int -> (B, H, W) f32."""
    B, C, H, W = logits.shape
    assert target.shape == (B, H, W)
    P = H * W
    LANE = 128

    if isinstance(alpha, float):
        alpha = (alpha, 1.0 - alpha)            # matches torch.Tensor([a, 1-a])
    if alpha is not None:
        alpha = tuple(float(a) for a in alpha)
        assert len(alpha) >= C, "alpha must have one weight per class"

    # Native layout: (B, C, P) / (B, P).  No class-major transpose.
    x = logits.reshape(B, C, P)
    t = target.reshape(B, P)
    if t.dtype != jnp.int8:                     # int8 callers keep the 1-byte stream
        t = t.astype(jnp.int32)

    # Pad the pixel axis ONLY if it is not lane-aligned (padded pixels use
    # class-0 targets and zero logits -> finite loss, sliced off below).
    Pp = pl.cdiv(P, LANE) * LANE
    if Pp != P:
        x = jnp.pad(x, ((0, 0), (0, 0), (0, Pp - P)))
        t = jnp.pad(t, ((0, 0), (0, Pp - P)))
    R = Pp // LANE

    x4 = x.reshape(B, C, R, LANE)               # free reshapes, no HBM copy
    t3 = t.reshape(B, R, LANE)

    # Large lane-dense pixel tiles (~512 rows) to sit near the HBM roofline;
    # shrink (keeping multiples of 32 rows for the int8 target tile) only if
    # needed so v7x's two TensorCores get >= 4 parallel grid steps.
    block_rows = min(R, 512)
    while block_rows >= 256 and block_rows % 64 == 0 and B * pl.cdiv(R, block_rows) < 4:
        block_rows //= 2
    n_tiles = pl.cdiv(R, block_rows)            # partial last tile is fine

    kernel = functools.partial(
        _focal_kernel, gamma=gamma, alpha=alpha, num_classes=C)

    # Only raise the scoped-VMEM limit when the double-buffered working set
    # would exceed the small v5e default; normally blocks are a few hundred KB.
    x_bytes = C * block_rows * LANE * np.dtype(logits.dtype).itemsize
    t_bytes = block_rows * LANE * np.dtype(t3.dtype).itemsize
    o_bytes = block_rows * LANE * 4
    pipeline_bytes = 2 * (x_bytes + t_bytes + o_bytes)
    cparams = dict(dimension_semantics=("parallel", "parallel"))
    if pipeline_bytes > 12 * 1024 * 1024:
        cparams["vmem_limit_bytes"] = int(min(4 * pipeline_bytes, 96 * 1024 * 1024))

    out = pl.pallas_call(
        kernel,
        out_shape=jax.ShapeDtypeStruct((B, R, LANE), jnp.float32),
        grid_spec=pltpu.PrefetchScalarGridSpec(
            num_scalar_prefetch=0,
            grid=(B, n_tiles),
            in_specs=[
                # class axis leading inside the block; batch dim squeezed out
                pl.BlockSpec((None, C, block_rows, LANE),
                             lambda b, i: (b, 0, i, 0)),
                pl.BlockSpec((None, block_rows, LANE),
                             lambda b, i: (b, i, 0)),
            ],
            out_specs=pl.BlockSpec((None, block_rows, LANE),
                                   lambda b, i: (b, i, 0)),
        ),
        compiler_params=pltpu.CompilerParams(**cparams),
    )(x4, t3)

    out = out.reshape(B, Pp)
    if Pp != P:
        out = out[:, :P]
    return out.reshape(B, H, W)


# ---------------------------- pure-JAX reference ----------------------------

def focal_loss_ref(logits, target, gamma=2.0, alpha=None):
    B, C, H, W = logits.shape
    x = jnp.transpose(logits.reshape(B, C, -1), (0, 2, 1)).reshape(-1, C)
    x = x.astype(jnp.float32)
    t = target.reshape(-1).astype(jnp.int32)
    logp = jax.nn.log_softmax(x, axis=1)
    logpt = jnp.take_along_axis(logp, t[:, None], axis=1)[:, 0]
    pt = jnp.exp(logpt)
    if alpha is not None:
        if isinstance(alpha, float):
            a = jnp.array([alpha, 1.0 - alpha], jnp.float32)
        else:
            a = jnp.asarray(alpha, jnp.float32)
        logpt = logpt * a[t]
    loss = -((1.0 - pt) ** gamma) * logpt
    return loss.reshape(B, H, W)


# ----------------------------------- main ------------------------------------

if __name__ == "__main__":
    key = jax.random.PRNGKey(0)
    k1, k2, k3, k4 = jax.random.split(key, 4)

    # PixelLink "pos" head: 2 classes, alpha = 0.25, gamma = 2, int8 targets
    B, C, H, W = 2, 2, 16, 16
    logits = jax.random.normal(k1, (B, C, H, W), jnp.float32)
    target = jax.random.randint(k2, (B, H, W), 0, C, jnp.int32).astype(jnp.int8)

    fwd = jax.jit(functools.partial(focal_loss, gamma=2.0, alpha=0.25))
    loss = fwd(logits, target)
    jax.block_until_ready(loss)

    ref = focal_loss_ref(logits, target, gamma=2.0, alpha=0.25)
    assert loss.shape == (B, H, W)
    assert bool(jnp.all(jnp.isfinite(loss)))
    np.testing.assert_allclose(np.asarray(loss), np.asarray(ref),
                               rtol=1e-5, atol=1e-6)

    # second config: 4 classes, no alpha, non-lane-aligned pixel count, int32 targets
    B2, C2, H2, W2 = 2, 4, 8, 7
    logits2 = jax.random.normal(k3, (B2, C2, H2, W2), jnp.float32)
    target2 = jax.random.randint(k4, (B2, H2, W2), 0, C2, jnp.int32)
    fwd2 = jax.jit(functools.partial(focal_loss, gamma=2.0, alpha=None))
    loss2 = fwd2(logits2, target2)
    jax.block_until_ready(loss2)
    ref2 = focal_loss_ref(logits2, target2, gamma=2.0, alpha=None)
    assert loss2.shape == (B2, H2, W2)
    np.testing.assert_allclose(np.asarray(loss2), np.asarray(ref2),
                               rtol=1e-5, atol=1e-6)

    print("KERNEL_OK")
</pallas_src>

<mosaic_0001>
module attributes {stable_mosaic.version = 11 : i64} {
  func.func @_focal_kernel(%arg0: i32, %arg1: i32, %arg2: memref<1x2x2x128xf32, #tpu.memory_space<vmem>>, %arg3: memref<1x2x128xi8, #tpu.memory_space<vmem>>, %arg4: memref<1x2x128xf32, #tpu.memory_space<vmem>>) attributes {dimension_semantics = [#tpu.dimension_semantics<parallel>, #tpu.dimension_semantics<parallel>], iteration_bounds = array<i64: 2, 1>, scalar_prefetch = 0 : i64, scratch_operands = 0 : i64, tpu.core_type = #tpu.core_type<tc>, window_params = [{transform_indices = @transform_0, window_bounds = array<i64: 1, 2, 2, 128>}, {transform_indices = @transform_1, window_bounds = array<i64: 1, 2, 128>}, {transform_indices = @transform_2, window_bounds = array<i64: 1, 2, 128>}]} {
    %c0 = arith.constant 0 : index
    %c0_0 = arith.constant 0 : index
    %c0_1 = arith.constant 0 : index
    %0 = vector.load %arg3[%c0, %c0_0, %c0_1] : memref<1x2x128xi8, #tpu.memory_space<vmem>>, vector<1x2x128xi8>
    %1 = vector.shape_cast %0 : vector<1x2x128xi8> to vector<2x128xi8>
    %2 = arith.extsi %1 : vector<2x128xi8> to vector<2x128xi32>
    %c0_2 = arith.constant 0 : index
    %c0_3 = arith.constant 0 : index
    %c0_4 = arith.constant 0 : index
    %c0_5 = arith.constant 0 : index
    %3 = vector.load %arg2[%c0_2, %c0_3, %c0_4, %c0_5] : memref<1x2x2x128xf32, #tpu.memory_space<vmem>>, vector<1x1x2x128xf32>
    %4 = vector.shape_cast %3 : vector<1x1x2x128xf32> to vector<2x128xf32>
    %c0_6 = arith.constant 0 : index
    %c1 = arith.constant 1 : index
    %c0_7 = arith.constant 0 : index
    %c0_8 = arith.constant 0 : index
    %5 = vector.load %arg2[%c0_6, %c1, %c0_7, %c0_8] : memref<1x2x2x128xf32, #tpu.memory_space<vmem>>, vector<1x1x2x128xf32>
    %6 = vector.shape_cast %5 : vector<1x1x2x128xf32> to vector<2x128xf32>
    %7 = arith.maximumf %4, %6 : vector<2x128xf32>
    %cst = arith.constant 0.000000e+00 : f32
    %8 = vector.broadcast %cst : f32 to vector<2x128xf32>
    %cst_9 = arith.constant 0.000000e+00 : f32
    %9 = vector.broadcast %cst_9 : f32 to vector<2x128xf32>
    %cst_10 = arith.constant 0.000000e+00 : f32
    %10 = vector.broadcast %cst_10 : f32 to vector<2x128xf32>
    %cst_11 = arith.constant 0.000000e+00 : f32
    %11 = vector.broadcast %cst_11 : f32 to vector<2x128xf32>
    %c0_12 = arith.constant 0 : index
    %c0_13 = arith.constant 0 : index
    %c0_14 = arith.constant 0 : index
    %c0_15 = arith.constant 0 : index
    %12 = vector.load %arg2[%c0_12, %c0_13, %c0_14, %c0_15] : memref<1x2x2x128xf32, #tpu.memory_space<vmem>>, vector<1x1x2x128xf32>
    %13 = vector.shape_cast %12 : vector<1x1x2x128xf32> to vector<2x128xf32>
    %14 = arith.subf %13, %7 : vector<2x128xf32>
    %15 = math.exp %14 : vector<2x128xf32>
    %16 = arith.addf %8, %15 : vector<2x128xf32>
    %c0_i32 = arith.constant 0 : i32
    %17 = vector.broadcast %c0_i32 : i32 to vector<2x128xi32>
    %18 = arith.cmpi eq, %2, %17 : vector<2x128xi32>
    %19 = arith.select %18, %13, %10 : vector<2x128xi1>, vector<2x128xf32>
    %20 = arith.select %18, %15, %9 : vector<2x128xi1>, vector<2x128xf32>
    %cst_16 = arith.constant 2.500000e-01 : f32
    %21 = vector.broadcast %cst_16 : f32 to vector<2x128xf32>
    %22 = arith.select %18, %21, %11 : vector<2x128xi1>, vector<2x128xf32>
    %c0_17 = arith.constant 0 : index
    %c1_18 = arith.constant 1 : index
    %c0_19 = arith.constant 0 : index
    %c0_20 = arith.constant 0 : index
    %23 = vector.load %arg2[%c0_17, %c1_18, %c0_19, %c0_20] : memref<1x2x2x128xf32, #tpu.memory_space<vmem>>, vector<1x1x2x128xf32>
    %24 = vector.shape_cast %23 : vector<1x1x2x128xf32> to vector<2x128xf32>
    %25 = arith.subf %24, %7 : vector<2x128xf32>
    %26 = math.exp %25 : vector<2x128xf32>
    %27 = arith.addf %16, %26 : vector<2x128xf32>
    %c1_i32 = arith.constant 1 : i32
    %28 = vector.broadcast %c1_i32 : i32 to vector<2x128xi32>
    %29 = arith.cmpi eq, %2, %28 : vector<2x128xi32>
    %30 = arith.select %29, %24, %19 : vector<2x128xi1>, vector<2x128xf32>
    %31 = arith.select %29, %26, %20 : vector<2x128xi1>, vector<2x128xf32>
    %cst_21 = arith.constant 7.500000e-01 : f32
    %32 = vector.broadcast %cst_21 : f32 to vector<2x128xf32>
    %33 = arith.select %29, %32, %22 : vector<2x128xi1>, vector<2x128xf32>
    %34 = arith.subf %30, %7 : vector<2x128xf32>
    %35 = math.log %27 : vector<2x128xf32>
    %36 = arith.subf %34, %35 : vector<2x128xf32>
    %37 = arith.divf %31, %27 : vector<2x128xf32>
    %38 = arith.mulf %36, %33 : vector<2x128xf32>
    %cst_22 = arith.constant 1.000000e+00 : f32
    %39 = vector.broadcast %cst_22 : f32 to vector<2x128xf32>
    %40 = arith.subf %39, %37 : vector<2x128xf32>
    %cst_23 = arith.constant 0.000000e+00 : f32
    %41 = vector.broadcast %cst_23 : f32 to vector<2x128xf32>
    %42 = arith.maximumf %40, %41 : vector<2x128xf32>
    %cst_24 = arith.constant 1.000000e+00 : f32
    %43 = vector.broadcast %cst_24 : f32 to vector<2x128xf32>
    %44 = arith.mulf %43, %42 : vector<2x128xf32>
    %45 = arith.mulf %44, %42 : vector<2x128xf32>
    %cst_25 = arith.constant 0.000000e+00 : f32
    %46 = vector.broadcast %cst_25 : f32 to vector<2x128xf32>
    %47 = arith.subf %46, %45 : vector<2x128xf32>
    %48 = arith.mulf %47, %38 : vector<2x128xf32>
    %c0_26 = arith.constant 0 : index
    %c0_27 = arith.constant 0 : index
    %c0_28 = arith.constant 0 : index
    %49 = vector.load %arg4[%c0_26, %c0_27, %c0_28] : memref<1x2x128xf32, #tpu.memory_space<vmem>>, vector<1x2x128xf32>
    %50 = vector.shape_cast %49 : vector<1x2x128xf32> to vector<2x128xf32>
    %51 = vector.shape_cast %48 : vector<2x128xf32> to vector<1x2x128xf32>
    tpu.vector_store %arg4[%c0_26, %c0_27, %c0_28], %51 {strides = array<i32>} : memref<1x2x128xf32, #tpu.memory_space<vmem>>, vector<1x2x128xf32>,
    return
  }
  func.func @transform_0(%arg0: i32, %arg1: i32) -> (i32, i32, i32, i32) {
    %c0_i32 = arith.constant 0 : i32
    %c0_i32_0 = arith.constant 0 : i32
    %c0_i32_1 = arith.constant 0 : i32
    return %arg0, %c0_i32, %arg1, %c0_i32_0 : i32, i32, i32, i32
  }
  func.func @transform_1(%arg0: i32, %arg1: i32) -> (i32, i32, i32) {
    %c0_i32 = arith.constant 0 : i32
    %c0_i32_0 = arith.constant 0 : i32
    return %arg0, %arg1, %c0_i32 : i32, i32, i32
  }
  func.func @transform_2(%arg0: i32, %arg1: i32) -> (i32, i32, i32) {
    %c0_i32 = arith.constant 0 : i32
    %c0_i32_0 = arith.constant 0 : i32
    return %arg0, %arg1, %c0_i32 : i32, i32, i32
  }
}

</mosaic_0001>

<llo_original>
// kernel: focal_loss.1
$region0: #{focal_loss.1}
  #allocation0 [shape = 'u32[]', space=smem, size = 0x4, offset = 0x4, fixed_abs, tag = 'smem constant byte address 0x4 - core index']
  #allocation1 [shape = 'u32[144,128]{1,0:T(1,128)}', space=vmem, size = 0x12000, scoped, tag = 'internal scratch']
  %s0 = inlined_call_operand.vmem [shape: f32[2,2,2,128], index: 0, kind: input, shape index: {}]
  %s1 = inlined_call_operand.vmem [shape: s8[2,2,128], index: 1, kind: input, shape index: {}]
  %s2 = inlined_call_operand.vmem [shape: f32[2,2,128], index: 2, kind: output, shape index: {}]
  %s3 = sld [smem:[#allocation0]]
  $region41: #{focal_loss.1} parent=0
    _
  %s5 = ssub.s32 1, %s3
  %s6 = scalar_select 0, %s5, %s3
  loop: start=0, step=1, limit=4
  $region2: #{focal_loss.1} parent=0 // loop_pre_header
    _
  $region3: #{focal_loss.1} parent=0 // loop_header
    %s8 = sphi 0, %s12
    %p9 = scmp.ge.s32.totalorder %s8, 4
    %s15 = sphi 0, %s27
    %s16 = sphi 0, %s23
    %s17 = sphi 0, %s15
    %s18 = sphi 0, %s16
    %s19 = sphi 0, %s17
    %s20 = sphi 0, %s18
    %s32 = sphi 0, %s34
    %s35 = sphi 0, %s32
    %s36 = sphi 0, %s35
    %s52 = sphi 0, %s36
    %s60 = sphi 0, %s62
    %s63 = sphi 0, %s60
    %s64 = sphi 0, %s63
    %s80 = sphi 0, %s64
    %s88 = sphi 0, %s90
    %s91 = sphi 0, %s88
    %s92 = sphi 0, %s91
    %s108 = sphi 0, %s92
  $region4: #{focal_loss.1} parent=0 // loop_header_branch
    %11 = sbr.rel (%p9) target = $region8
  $region5: #{focal_loss.1} parent=0 // loop_body
    %s13 = ssub.s32 %s8, 1
    %s14 = ssub.s32 %s8, 2
    %s21 = sadd.s32 1, %s16
    %p22 = scmp.ge.s32.totalorder %s21, 1
    %s23 = scalar_select %p22, 0, %s21
    %s24 = sadd.s32 1, %s15
    %s25 = scalar_select %p22, %s24, %s15
    %p26 = scmp.ge.s32.totalorder %s25, 2
    %s27 = scalar_select %p26, 0, %s25
    %s28 = ssub.s32 %s15, %s27
    %s29 = ssub.s32 %s16, %s23
    %s30 = sor.u32 %s28, %s29
    %p31 = scmp.eq.s32.totalorder %s30, 0
    %s33 = sadd.s32 %s32, 1
    %s34 = scalar_select %p31, %s32, %s33
    %p37 = pneg %p31
    %p38 = scmp.eq.s32.totalorder %s8, 1
    %p39 = por %p37, %p38
    %p40 = scmp.ne.s32.totalorder %s32, %s35
    %p41 = scmp.eq.s32.totalorder %s8, 0
    %p42 = por %p40, %p41
    %p43 = scmp.ne.s32.totalorder %s32, %s35
    %p44 = scmp.eq.s32.totalorder %s13, 1
    %p45 = por %p43, %p44
    %p46 = scmp.ne.s32.totalorder %s35, %s36
    %p47 = scmp.eq.s32.totalorder %s13, 0
    %p48 = por %p46, %p47
    %p49 = scmp.ne.s32.totalorder %s35, %s36
    %p50 = scmp.eq.s32.totalorder %s14, 1
    %p51 = por %p49, %p50
    %p53 = scmp.ne.s32.totalorder %s36, %s52
    %p54 = scmp.eq.s32.totalorder %s14, 0
    %p55 = por %p53, %p54
    %s56 = ssub.s32 %s15, %s27
    %s57 = ssub.s32 %s16, %s23
    %s58 = sor.u32 %s56, %s57
    %p59 = scmp.eq.s32.totalorder %s58, 0
    %s61 = sadd.s32 %s60, 1
    %s62 = scalar_select %p59, %s60, %s61
    %p65 = pneg %p59
    %p66 = scmp.eq.s32.totalorder %s8, 1
    %p67 = por %p65, %p66
    %p68 = scmp.ne.s32.totalorder %s60, %s63
    %p69 = scmp.eq.s32.totalorder %s8, 0
    %p70 = por %p68, %p69
    %p71 = scmp.ne.s32.totalorder %s60, %s63
    %p72 = scmp.eq.s32.totalorder %s13, 1
    %p73 = por %p71, %p72
    %p74 = scmp.ne.s32.totalorder %s63, %s64
    %p75 = scmp.eq.s32.totalorder %s13, 0
    %p76 = por %p74, %p75
    %p77 = scmp.ne.s32.totalorder %s63, %s64
    %p78 = scmp.eq.s32.totalorder %s14, 1
    %p79 = por %p77, %p78
    %p81 = scmp.ne.s32.totalorder %s64, %s80
    %p82 = scmp.eq.s32.totalorder %s14, 0
    %p83 = por %p81, %p82
    %s84 = ssub.s32 %s15, %s27
    %s85 = ssub.s32 %s16, %s23
    %s86 = sor.u32 %s84, %s85
    %p87 = scmp.eq.s32.totalorder %s86, 0
    %s89 = sadd.s32 %s88, 1
    %s90 = scalar_select %p87, %s88, %s89
    %p93 = pneg %p87
    %p94 = scmp.eq.s32.totalorder %s8, 1
    %p95 = por %p93, %p94
    %p96 = scmp.ne.s32.totalorder %s88, %s91
    %p97 = scmp.eq.s32.totalorder %s8, 0
    %p98 = por %p96, %p97
    %p99 = scmp.ne.s32.totalorder %s88, %s91
    %p100 = scmp.eq.s32.totalorder %s13, 1
    %p101 = por %p99, %p100
    %p102 = scmp.ne.s32.totalorder %s91, %s92
    %p103 = scmp.eq.s32.totalorder %s13, 0
    %p104 = por %p102, %p103
    %p105 = scmp.ne.s32.totalorder %s91, %s92
    %p106 = scmp.eq.s32.totalorder %s14, 1
    %p107 = por %p105, %p106
    %p109 = scmp.ne.s32.totalorder %s92, %s108
    %p110 = scmp.eq.s32.totalorder %s14, 0
    %p111 = por %p109, %p110
    %p112 = scmp.le.s32.totalorder 1, %s8
    %p113 = scmp.lt.s32.totalorder %s8, 3
    %p114 = pnand %p112, %p113
    %p115 = pneg %p114
    // Predicated region
    $region9: #{focal_loss.1} parent=5 // pred_check
      _
    $region10: #{focal_loss.1} parent=5 // pred_check_branch
      %117 = sbr.rel (%p114) target = $region12
    $region11: #{focal_loss.1} parent=5 // pred_region
      %s118 = ssub.s32 %s8, 1
    $region12: #{focal_loss.1} parent=5 // pred_fallthru
      _
    %p119 = scmp.lt.s32.totalorder %s8, 2
    // Predicated region
    $region13: #{focal_loss.1} parent=5 // pred_check
      %p120 = pneg %p119
    $region14: #{focal_loss.1} parent=5 // pred_check_branch
      %122 = sbr.rel (%p120) target = $region16
    $region15: #{focal_loss.1} parent=5 // pred_region
      // Predicated region
      $region17: #{focal_loss.1} parent=15 // pred_check
        %p123 = pneg %p42
      $region18: #{focal_loss.1} parent=15 // pred_check_branch
        %125 = sbr.rel (%p123) target = $region20
      $region19: #{focal_loss.1} parent=15 // pred_region
        %p126 = scmp.lt.s32.totalorder %s15, 1
        %s127 = scalar_select %p126, %s15, 1
        %p128 = scmp.lt.s32.totalorder %s16, 0
        %s129 = scalar_select %p128, %s16, 0
        %s130 = smul.addr %s127, 2
        %s131 = sadd.s32 %s129, %s130
        %s132 = smul.addr %s131, 2
        %s133 = scalar_lea.vmem %s0, %s132
      $region20: #{focal_loss.1} parent=15 // pred_fallthru
        _
      // Predicated region
      $region21: #{focal_loss.1} parent=15 // pred_check
        %p134 = pneg %p70
      $region22: #{focal_loss.1} parent=15 // pred_check_branch
        %136 = sbr.rel (%p134) target = $region24
      $region23: #{focal_loss.1} parent=15 // pred_region
        %p137 = scmp.lt.s32.totalorder %s15, 1
        %s138 = scalar_select %p137, %s15, 1
        %p139 = scmp.lt.s32.totalorder %s16, 0
        %s140 = scalar_select %p139, %s16, 0
        %s141 = sadd.s32 %s140, %s138
        %s142 = scalar_lea.vmem %s1, %s141
      $region24: #{focal_loss.1} parent=15 // pred_fallthru
        _
    $region16: #{focal_loss.1} parent=5 // pred_fallthru
      _
    %p143 = scmp.le.s32.totalorder 1, %s8
    %p144 = scmp.lt.s32.totalorder %s8, 3
    %p145 = pnand %p143, %p144
    %p146 = pneg %p145
    // Predicated region
    $region25: #{focal_loss.1} parent=5 // pred_check
      _
    $region26: #{focal_loss.1} parent=5 // pred_check_branch
      %148 = sbr.rel (%p145) target = $region28
    $region27: #{focal_loss.1} parent=5 // pred_region
      %s149 = ssub.s32 %s8, 1
      %p150 = scmp.lt.s32.totalorder %s17, 1
      %s151 = scalar_select %p150, %s17, 1
      %p152 = scmp.lt.s32.totalorder %s18, 0
      %s153 = scalar_select %p152, %s18, 0
      %s154 = smul.addr %s151, 2
      %s155 = sadd.s32 %s153, %s154
      %s156 = smul.addr %s155, 2
      %s157 = scalar_lea.vmem %s0, %s156
      %p158 = pneg %p48
      %p159 = pneg %p45
      %p160 = scmp.lt.s32.totalorder %s17, 1
      %s161 = scalar_select %p160, %s17, 1
      %p162 = scmp.lt.s32.totalorder %s18, 0
      %s163 = scalar_select %p162, %s18, 0
      %s164 = sadd.s32 %s163, %s161
      %s165 = scalar_lea.vmem %s1, %s164
      %p166 = pneg %p76
      %p167 = pneg %p73
      %p168 = pneg %p104
      %p169 = pneg %p101
      %p170 = scmp.lt.s32.totalorder %s17, 1
      %s171 = scalar_select %p170, %s17, 1
      %p172 = scmp.lt.s32.totalorder %s18, 0
      %s173 = scalar_select %p172, %s18, 0
      %s174 = sadd.s32 %s173, %s171
      %s175 = smul.addr %s174, 2
      %s176 = scalar_lea.vmem %s2, %s175
      %p177 = scmp.lt.s32.totalorder %s17, 1
      %s178 = scalar_select %p177, %s17, 1
      %p179 = scmp.lt.s32.totalorder %s18, 0
      %s180 = scalar_select %p179, %s18, 0
      %s181 = smul.addr %s178, 2
      %s182 = sadd.s32 %s180, %s181
      %s183 = smul.addr %s182, 2
      %s184 = scalar_lea.vmem %s0, %s183
      %p185 = scmp.lt.s32.totalorder %s17, 1
      %s186 = scalar_select %p185, %s17, 1
      %p187 = scmp.lt.s32.totalorder %s18, 0
      %s188 = scalar_select %p187, %s18, 0
      %s189 = sadd.s32 %s188, %s186
      %s190 = scalar_lea.vmem %s1, %s189
      %p191 = scmp.lt.s32.totalorder %s17, 1
      %s192 = scalar_select %p191, %s17, 1
      %p193 = scmp.lt.s32.totalorder %s18, 0
      %s194 = scalar_select %p193, %s18, 0
      %s195 = sadd.s32 %s194, %s192
      %s196 = smul.addr %s195, 2
      %s197 = scalar_lea.vmem %s2, %s196
      %v198 = vld [vmem:[%s190] sm:$0x1]
      %v199 = vunpack.c.0.s8 %v198
      %v200 = vld [vmem:[%s184] sm:$0x3]
      %s201 = scalar_lea.vmem %s184, 2
      %v202 = vld [vmem:[%s201] sm:$0x3]
      %v203 = vmax.f32 %v200, %v202
      %v204 = vsub.f32 %v200, %v203
      %v205 = vmul.f32 %v204, 1.442695
      %v206 = vpow.pop %v205
      %v207 = vadd.f32 %v206, 0.0
      %vm208 = vcmp.eq.s32.totalorder %v199, 0
      %v209 = vsel %vm208, %v200, 0.0
      %v210 = vsel %vm208, %v206, 0.0
      %v211 = vsel %vm208, 0.25, 0.0
      %v212 = vsub.f32 %v202, %v203
      %v213 = vmul.f32 %v212, 1.442695
      %v214 = vpow.pop %v213
      %v215 = vadd.f32 %v207, %v214
      %vm216 = vcmp.eq.s32.totalorder %v199, 1
      %v217 = vsel %vm216, %v202, %v209
      %v218 = vsel %vm216, %v214, %v210
      %v219 = vsel %vm216, 0.75, %v211
      %v220 = vsub.f32 %v217, %v203
      %v221 = vlog2.pop %v215
      %v222 = vmul.f32 %v221, 0.6931472
      %v223 = vsub.f32 %v220, %v222
      %v224 = vrcp.pop %v215
      %v225 = vmul.f32 %v218, %v224
      %v226 = vmul.f32 %v223, %v219
      %v227 = vsub.f32 1.0, %v225
      %v228 = vmax.f32 %v227, 0.0
      %v229 = vmul.f32 %v228, %v228
      %v230 = vsub.f32 0.0, %v229
      %v231 = vmul.f32 %v230, %v226
      %232 = vst [vmem:[%s197] sm:$0x3] %v231
      %p233 = scmp.lt.s32.totalorder %s17, 1
      %s234 = scalar_select %p233, %s17, 1
      %p235 = scmp.lt.s32.totalorder %s18, 0
      %s236 = scalar_select %p235, %s18, 0
      %s237 = sadd.s32 %s236, %s234
      %s238 = smul.addr %s237, 2
      %s239 = scalar_lea.vmem %s2, %s238
      // Predicated region
      $region29: #{focal_loss.1} parent=27 // pred_check
        %p240 = pneg %p101
      $region30: #{focal_loss.1} parent=27 // pred_check_branch
        %242 = sbr.rel (%p240) target = $region32
      $region31: #{focal_loss.1} parent=27 // pred_region
        _
      $region32: #{focal_loss.1} parent=27 // pred_fallthru
        _
    $region28: #{focal_loss.1} parent=5 // pred_fallthru
      _
    %p243 = scmp.le.s32.totalorder 2, %s8
    // Predicated region
    $region33: #{focal_loss.1} parent=5 // pred_check
      %p244 = pneg %p243
    $region34: #{focal_loss.1} parent=5 // pred_check_branch
      %246 = sbr.rel (%p244) target = $region36
    $region35: #{focal_loss.1} parent=5 // pred_region
      %s247 = ssub.s32 %s8, 2
      // Predicated region
      $region37: #{focal_loss.1} parent=35 // pred_check
        %p248 = pneg %p107
      $region38: #{focal_loss.1} parent=35 // pred_check_branch
        %250 = sbr.rel (%p248) target = $region40
      $region39: #{focal_loss.1} parent=35 // pred_region
        %p251 = scmp.lt.s32.totalorder %s19, 1
        %s252 = scalar_select %p251, %s19, 1
        %p253 = scmp.lt.s32.totalorder %s20, 0
        %s254 = scalar_select %p253, %s20, 0
        %s255 = sadd.s32 %s254, %s252
        %s256 = smul.addr %s255, 2
        %s257 = scalar_lea.vmem %s2, %s256
      $region40: #{focal_loss.1} parent=35 // pred_fallthru
        _
    $region36: #{focal_loss.1} parent=5 // pred_fallthru
      _
  $region6: #{focal_loss.1} parent=0 // loop_footer
    %s12 = sadd.s32 1, %s8
  $region7: #{focal_loss.1} parent=0 // loop_footer_branch
    %7 = sbr.rel target = $region3
  $region8: #{focal_loss.1} parent=0 // loop_exit
    _

</llo_original>
